<compile_context>
chip_gen: v5e
topology: v5e:2x2
jax: 0.10.0
libtpu: 0.0.40
codegen_flags: <defaults>
</compile_context>

<pallas_src>
import jax
import jax.numpy as jnp
from jax.experimental import pallas as pl
from jax.experimental.pallas import tpu as pltpu


def _sender_kernel(x_ref, w_ref, b_ref, o_ref):
    # x_ref: (K, tm)   input-pixel tile (pixels on the lane dim)
    # w_ref: (Nk, K)   resident transposed weight
    # b_ref: (Nk, 1)   resident bias column (f32)
    # o_ref: (Nk, tm)  lane-dense output tile
    acc = jnp.dot(w_ref[...], x_ref[...], preferred_element_type=jnp.float32)
    o_ref[...] = (acc + b_ref[...]).astype(o_ref.dtype)


def _choose_tile_m(M, K, Nk, in_bytes, out_bytes,
                   max_tile=4096, min_tile=256,
                   vmem_budget=24 * 1024 * 1024):
    """Pick a large, lane-aligned pixel tile that fits a conservative VMEM
    budget (double-buffered x + out tiles) and leaves >= 4 grid steps when the
    problem is big enough (v7x megacore)."""
    per_col = 2 * (K * in_bytes + Nk * out_bytes)   # double-buffered in + out
    tm = max_tile
    while tm > min_tile and tm * per_col > vmem_budget:
        tm //= 2
    while tm > min_tile and pl.cdiv(M, tm) < 4:
        tm //= 2
    return tm


def sender_forward(x, weight, bias, kernel_size, *,
                   tile_m=None, compute_dtype=None, out_dtype=None):
    """ConvTranspose2d(stride=kernel_size) forward via a Pallas matmul kernel.

    x:      [N, C_in, H, W]            (NCHW, like PyTorch)
    weight: [C_in, C_out, kh, kw]      (ConvTranspose2d convention)
    bias:   [C_out]
    returns [N, C_out, H*kh, W*kw]     (NCHW)
    """
    N, Cin, H, W = x.shape
    Cin_w, Cout, kh, kw = weight.shape
    assert Cin == Cin_w and kh == kernel_size and kw == kernel_size

    M = N * H * W            # flattened input pixels (n, h, w)
    K = Cin                  # tiny contraction dim — op is memory-bound
    Nk = Cout * kh * kw      # per-pixel output block (co, i, j)

    out_dtype = out_dtype or x.dtype
    compute_dtype = compute_dtype or x.dtype

    # --- cheap glue: channels-leading flat pixels and transposed weight ------
    xT = jnp.transpose(x, (1, 0, 2, 3)).reshape(K, M).astype(compute_dtype)
    wT = weight.reshape(K, Nk).T.astype(compute_dtype)            # (Nk, K)
    bT = jnp.repeat(bias.astype(jnp.float32), kh * kw)[:, None]   # (Nk, 1)

    tm = tile_m or _choose_tile_m(
        M, K, Nk,
        jnp.dtype(compute_dtype).itemsize, jnp.dtype(out_dtype).itemsize)
    grid_m = pl.cdiv(M, tm)
    M_pad = grid_m * tm
    if M_pad != M:
        xT = jnp.pad(xT, ((0, 0), (0, M_pad - M)))

    outT = pl.pallas_call(
        _sender_kernel,
        out_shape=jax.ShapeDtypeStruct((Nk, M_pad), out_dtype),
        grid=(grid_m,),
        in_specs=[
            pl.BlockSpec((K, tm), lambda i: (0, i)),    # pixel tile (lane-dense)
            pl.BlockSpec((Nk, K), lambda i: (0, 0)),    # full weight, resident
            pl.BlockSpec((Nk, 1), lambda i: (0, 0)),    # bias column, resident
        ],
        out_specs=pl.BlockSpec((Nk, tm), lambda i: (0, i)),
        compiler_params=pltpu.CompilerParams(
            dimension_semantics=("parallel",),
            vmem_limit_bytes=48 * 1024 * 1024,
        ),
    )(xT, wT, bT)

    # --- glue: scatter each pixel's (Cout, kh, kw) block into NCHW output ----
    outT = outT[:, :M]                                    # drop the pad columns
    out = outT.reshape(Cout, kh, kw, N, H, W)
    out = jnp.transpose(out, (3, 0, 4, 1, 5, 2))          # (N, Cout, H, kh, W, kw)
    return out.reshape(N, Cout, H * kh, W * kw)


if __name__ == "__main__":
    key = jax.random.PRNGKey(0)
    k1, k2, k3 = jax.random.split(key, 3)

    # Small shapes consistent with the module: NCHW input.
    N, Cin, H, W = 2, 4, 16, 16
    Cout, ks = 8, 3

    x = jax.random.normal(k1, (N, Cin, H, W), dtype=jnp.float32)
    weight = jax.random.normal(k2, (Cin, Cout, ks, ks), dtype=jnp.float32) * 0.1
    bias = jax.random.normal(k3, (Cout,), dtype=jnp.float32) * 0.1

    def conv_transpose_ref(x_, w_, b_, k):
        n, _, h, w = x_.shape
        _, d, ki, kj = w_.shape
        r = jnp.einsum("nchw,cdij->ndhiwj", x_, w_)
        return r.reshape(n, d, h * ki, w * kj) + b_[None, :, None, None]

    # f32 path
    out = jax.block_until_ready(sender_forward(x, weight, bias, ks))
    ref = conv_transpose_ref(x, weight, bias, ks)
    assert out.shape == (N, Cout, H * ks, W * ks), out.shape
    assert jnp.allclose(out, ref, atol=1e-4, rtol=1e-4)

    # bf16-compute path (halves HBM bytes moved; f32 accumulate + bias inside).
    out_bf = jax.block_until_ready(
        sender_forward(x, weight, bias, ks, compute_dtype=jnp.bfloat16))
    assert jnp.allclose(out_bf, ref, atol=5e-2, rtol=5e-2)

    # Ragged pixel count (M not a multiple of the tile) exercises the padded grid.
    H2, W2 = 10, 16
    x2 = jax.random.normal(k1, (N, Cin, H2, W2), dtype=jnp.float32)
    out2 = jax.block_until_ready(sender_forward(x2, weight, bias, ks))
    ref2 = conv_transpose_ref(x2, weight, bias, ks)
    assert out2.shape == (N, Cout, H2 * ks, W2 * ks), out2.shape
    assert jnp.allclose(out2, ref2, atol=1e-4, rtol=1e-4)

    print("KERNEL_OK")
</pallas_src>

<mosaic_0001>
module attributes {stable_mosaic.version = 11 : i64} {
  func.func @_sender_kernel(%arg0: i32, %arg1: memref<4x256xf32, #tpu.memory_space<vmem>>, %arg2: memref<72x4xf32, #tpu.memory_space<vmem>>, %arg3: memref<72x1xf32, #tpu.memory_space<vmem>>, %arg4: memref<72x256xf32, #tpu.memory_space<vmem>>) attributes {dimension_semantics = [#tpu.dimension_semantics<parallel>], iteration_bounds = array<i64: 2>, scalar_prefetch = 0 : i64, scratch_operands = 0 : i64, tpu.core_type = #tpu.core_type<tc>, window_params = [{transform_indices = @transform_0, window_bounds = array<i64: 4, 256>}, {pipeline_mode = #tpu.pipeline_mode<synchronous>, transform_indices = @transform_1, window_bounds = array<i64: 72, 4>}, {pipeline_mode = #tpu.pipeline_mode<synchronous>, transform_indices = @transform_2, window_bounds = array<i64: 72, 1>}, {transform_indices = @transform_3, window_bounds = array<i64: 72, 256>}]} {
    %c0 = arith.constant 0 : index
    %c0_0 = arith.constant 0 : index
    %0 = vector.load %arg2[%c0, %c0_0] : memref<72x4xf32, #tpu.memory_space<vmem>>, vector<72x4xf32>
    %c0_1 = arith.constant 0 : index
    %c0_2 = arith.constant 0 : index
    %1 = vector.load %arg1[%c0_1, %c0_2] : memref<4x256xf32, #tpu.memory_space<vmem>>, vector<4x256xf32>
    %cst = arith.constant dense<0.000000e+00> : vector<72x256xf32>
    %2 = tpu.matmul %0, %1, %cst {dimension_numbers = #tpu.dot_dimension_numbers<[1], [0], [0], [1], [0, 0, 1, 1], [], []>} : vector<72x4xf32>, vector<4x256xf32>, vector<72x256xf32> -> vector<72x256xf32>
    %c0_3 = arith.constant 0 : index
    %c0_4 = arith.constant 0 : index
    %3 = vector.load %arg3[%c0_3, %c0_4] : memref<72x1xf32, #tpu.memory_space<vmem>>, vector<72x1xf32>
    %4 = vector.broadcast %3 : vector<72x1xf32> to vector<72x256xf32>
    %5 = arith.addf %2, %4 : vector<72x256xf32>
    %c0_5 = arith.constant 0 : index
    %c0_6 = arith.constant 0 : index
    %6 = vector.load %arg4[%c0_5, %c0_6] : memref<72x256xf32, #tpu.memory_space<vmem>>, vector<72x256xf32>
    tpu.vector_store %arg4[%c0_5, %c0_6], %5 {strides = array<i32>} : memref<72x256xf32, #tpu.memory_space<vmem>>, vector<72x256xf32>,
    return
  }
  func.func @transform_0(%arg0: i32) -> (i32, i32) {
    %c0_i32 = arith.constant 0 : i32
    %c0_i32_0 = arith.constant 0 : i32
    return %c0_i32, %arg0 : i32, i32
  }
  func.func @transform_1(%arg0: i32) -> (i32, i32) {
    %c0_i32 = arith.constant 0 : i32
    %c0_i32_0 = arith.constant 0 : i32
    %c0_i32_1 = arith.constant 0 : i32
    return %c0_i32, %c0_i32_0 : i32, i32
  }
  func.func @transform_2(%arg0: i32) -> (i32, i32) {
    %c0_i32 = arith.constant 0 : i32
    %c0_i32_0 = arith.constant 0 : i32
    %c0_i32_1 = arith.constant 0 : i32
    return %c0_i32, %c0_i32_0 : i32, i32
  }
  func.func @transform_3(%arg0: i32) -> (i32, i32) {
    %c0_i32 = arith.constant 0 : i32
    %c0_i32_0 = arith.constant 0 : i32
    return %c0_i32, %arg0 : i32, i32
  }
}

</mosaic_0001>

<llo_original>
// kernel: tpu_custom_call.1
$region0: #{tpu_custom_call.1}
  #allocation0 [shape = 'u32[]', space=smem, size = 0x4, offset = 0x4, fixed_abs, tag = 'smem constant byte address 0x4 - core index']
  #allocation1 [shape = 'u32[72,128]{1,0:T(1,128)}', space=vmem, size = 0x9000, scoped, tag = 'internal scratch']
  %s0 = inlined_call_operand.vmem [shape: f32[4,512], index: 0, kind: input, shape index: {}]
  %s1 = inlined_call_operand.vmem [shape: f32[72,4], index: 1, kind: input, shape index: {}]
  %s2 = inlined_call_operand.vmem [shape: f32[72,1], index: 2, kind: input, shape index: {}]
  %s3 = inlined_call_operand.hbm [shape: f32[72,512], index: 3, kind: output, shape index: {}]
  %s4 = sld [smem:[#allocation0]]
  $region45: #{tpu_custom_call.1} parent=0
    _
  %s6 = ssub.s32 1, %s4
  %s7 = scalar_select 0, %s6, %s4
  $region1: #{tpu_custom_call.1} parent=0
    #allocation2 [shape = 'u8[147456]{0}', space=vmem, size = 0x24000, scoped, tag = 'output window, operand 0']
    #allocation3 [shape = 's32[2]{0}', space=sflag, size = 0x8, scoped, tag = 'scoped memory for tpu_custom_call.1']
    %8 = vsyncpa [#allocation3], 0
    %s9 = scalar_lea.sflag [#allocation3], 1
    %10 = vsyncpa %s9, 0
    loop: start=0, step=1, limit=4
    $region2: #{tpu_custom_call.1} parent=1 // loop_pre_header
      _
    $region3: #{tpu_custom_call.1} parent=1 // loop_header
      %s12 = sphi 0, %s16
      %p13 = scmp.ge.s32.totalorder %s12, 4
      %s22 = sphi 0, %s24
      %s25 = sphi 0, %s22
      %s26 = sphi 0, %s25
      %s42 = sphi 0, %s26
      %s46 = sphi 0, %s46
      %s48 = sphi 0, %s46
      %s49 = sphi 0, %s48
      %s63 = sphi 0, %s49
      %s67 = sphi 0, %s67
      %s69 = sphi 0, %s67
      %s70 = sphi 0, %s69
      %s84 = sphi 0, %s70
      %s90 = sphi 0, %s92
      %s93 = sphi 0, %s90
      %s94 = sphi 0, %s93
      %s110 = sphi 0, %s94
    $region4: #{tpu_custom_call.1} parent=1 // loop_header_branch
      %15 = sbr.rel (%p13) target = $region8
    $region5: #{tpu_custom_call.1} parent=1 // loop_body
      %s17 = ssub.s32 %s12, 1
      %s18 = ssub.s32 %s12, 2
      %s19 = sadd.s32 %s12, 1
      %s20 = ssub.s32 %s12, %s19
      %p21 = scmp.eq.s32.totalorder %s20, 0
      %s23 = sadd.s32 %s22, 1
      %s24 = scalar_select %p21, %s22, %s23
      %p27 = pneg %p21
      %p28 = scmp.eq.s32.totalorder %s12, 1
      %p29 = por %p27, %p28
      %p30 = scmp.ne.s32.totalorder %s22, %s25
      %p31 = scmp.eq.s32.totalorder %s12, 0
      %p32 = por %p30, %p31
      %p33 = scmp.ne.s32.totalorder %s22, %s25
      %p34 = scmp.eq.s32.totalorder %s17, 1
      %p35 = por %p33, %p34
      %p36 = scmp.ne.s32.totalorder %s25, %s26
      %p37 = scmp.eq.s32.totalorder %s17, 0
      %p38 = por %p36, %p37
      %p39 = scmp.ne.s32.totalorder %s25, %s26
      %p40 = scmp.eq.s32.totalorder %s18, 1
      %p41 = por %p39, %p40
      %p43 = scmp.ne.s32.totalorder %s26, %s42
      %p44 = scmp.eq.s32.totalorder %s18, 0
      %p45 = por %p43, %p44
      %s47 = sadd.s32 %s46, 1
      %p50 = scmp.eq.s32.totalorder %s12, 1
      %p51 = scmp.ne.s32.totalorder %s46, %s48
      %p52 = scmp.eq.s32.totalorder %s12, 0
      %p53 = por %p51, %p52
      %p54 = scmp.ne.s32.totalorder %s46, %s48
      %p55 = scmp.eq.s32.totalorder %s17, 1
      %p56 = por %p54, %p55
      %p57 = scmp.ne.s32.totalorder %s48, %s49
      %p58 = scmp.eq.s32.totalorder %s17, 0
      %p59 = por %p57, %p58
      %p60 = scmp.ne.s32.totalorder %s48, %s49
      %p61 = scmp.eq.s32.totalorder %s18, 1
      %p62 = por %p60, %p61
      %p64 = scmp.ne.s32.totalorder %s49, %s63
      %p65 = scmp.eq.s32.totalorder %s18, 0
      %p66 = por %p64, %p65
      %s68 = sadd.s32 %s67, 1
      %p71 = scmp.eq.s32.totalorder %s12, 1
      %p72 = scmp.ne.s32.totalorder %s67, %s69
      %p73 = scmp.eq.s32.totalorder %s12, 0
      %p74 = por %p72, %p73
      %p75 = scmp.ne.s32.totalorder %s67, %s69
      %p76 = scmp.eq.s32.totalorder %s17, 1
      %p77 = por %p75, %p76
      %p78 = scmp.ne.s32.totalorder %s69, %s70
      %p79 = scmp.eq.s32.totalorder %s17, 0
      %p80 = por %p78, %p79
      %p81 = scmp.ne.s32.totalorder %s69, %s70
      %p82 = scmp.eq.s32.totalorder %s18, 1
      %p83 = por %p81, %p82
      %p85 = scmp.ne.s32.totalorder %s70, %s84
      %p86 = scmp.eq.s32.totalorder %s18, 0
      %p87 = por %p85, %p86
      %s88 = ssub.s32 %s12, %s19
      %p89 = scmp.eq.s32.totalorder %s88, 0
      %s91 = sadd.s32 %s90, 1
      %s92 = scalar_select %p89, %s90, %s91
      %p95 = pneg %p89
      %p96 = scmp.eq.s32.totalorder %s12, 1
      %p97 = por %p95, %p96
      %p98 = scmp.ne.s32.totalorder %s90, %s93
      %p99 = scmp.eq.s32.totalorder %s12, 0
      %p100 = por %p98, %p99
      %p101 = scmp.ne.s32.totalorder %s90, %s93
      %p102 = scmp.eq.s32.totalorder %s17, 1
      %p103 = por %p101, %p102
      %p104 = scmp.ne.s32.totalorder %s93, %s94
      %p105 = scmp.eq.s32.totalorder %s17, 0
      %p106 = por %p104, %p105
      %p107 = scmp.ne.s32.totalorder %s93, %s94
      %p108 = scmp.eq.s32.totalorder %s18, 1
      %p109 = por %p107, %p108
      %p111 = scmp.ne.s32.totalorder %s94, %s110
      %p112 = scmp.eq.s32.totalorder %s18, 0
      %p113 = por %p111, %p112
      %p114 = scmp.le.s32.totalorder 1, %s12
      %p115 = scmp.lt.s32.totalorder %s12, 3
      %p116 = pnand %p114, %p115
      %p117 = pneg %p116
      // Predicated region
      $region9: #{tpu_custom_call.1} parent=5 // pred_check
        _
      $region10: #{tpu_custom_call.1} parent=5 // pred_check_branch
        %119 = sbr.rel (%p116) target = $region12
      $region11: #{tpu_custom_call.1} parent=5 // pred_region
        %s120 = ssub.s32 %s12, 1
        // Predicated region
        $region13: #{tpu_custom_call.1} parent=11 // pred_check
          %p121 = pneg %p59
        $region14: #{tpu_custom_call.1} parent=11 // pred_check_branch
          %123 = sbr.rel (%p121) target = $region16
        $region15: #{tpu_custom_call.1} parent=11 // pred_region
          _
        $region16: #{tpu_custom_call.1} parent=11 // pred_fallthru
          _
        // Predicated region
        $region17: #{tpu_custom_call.1} parent=11 // pred_check
          %p124 = pneg %p80
        $region18: #{tpu_custom_call.1} parent=11 // pred_check_branch
          %126 = sbr.rel (%p124) target = $region20
        $region19: #{tpu_custom_call.1} parent=11 // pred_region
          _
        $region20: #{tpu_custom_call.1} parent=11 // pred_fallthru
          _
      $region12: #{tpu_custom_call.1} parent=5 // pred_fallthru
        _
      %p127 = scmp.lt.s32.totalorder %s12, 2
      // Predicated region
      $region21: #{tpu_custom_call.1} parent=5 // pred_check
        %p128 = pneg %p127
      $region22: #{tpu_custom_call.1} parent=5 // pred_check_branch
        %130 = sbr.rel (%p128) target = $region24
      $region23: #{tpu_custom_call.1} parent=5 // pred_region
        // Predicated region
        $region25: #{tpu_custom_call.1} parent=23 // pred_check
          %p131 = pneg %p32
        $region26: #{tpu_custom_call.1} parent=23 // pred_check_branch
          %133 = sbr.rel (%p131) target = $region28
        $region27: #{tpu_custom_call.1} parent=23 // pred_region
          %s134 = smul.u32 2, %s12
          %p135 = scmp.lt.s32.totalorder %s134, 3
          %s136 = scalar_select %p135, %s134, 3
          %s137 = smul.addr %s136, 4
          %s138 = scalar_lea.vmem %s0, %s137
          %s139 = smul.u32 2, %s12
        $region28: #{tpu_custom_call.1} parent=23 // pred_fallthru
          _
      $region24: #{tpu_custom_call.1} parent=5 // pred_fallthru
        _
      %p140 = scmp.le.s32.totalorder 1, %s12
      %p141 = scmp.lt.s32.totalorder %s12, 3
      %p142 = pnand %p140, %p141
      %p143 = pneg %p142
      // Predicated region
      $region29: #{tpu_custom_call.1} parent=5 // pred_check
        _
      $region30: #{tpu_custom_call.1} parent=5 // pred_check_branch
        %145 = sbr.rel (%p142) target = $region32
      $region31: #{tpu_custom_call.1} parent=5 // pred_region
        %s146 = ssub.s32 %s12, 1
        %s147 = smul.u32 2, %s17
        %p148 = scmp.lt.s32.totalorder %s147, 3
        %s149 = scalar_select %p148, %s147, 3
        %s150 = smul.addr %s149, 4
        %s151 = scalar_lea.vmem %s0, %s150
        %p152 = pneg %p38
        %p153 = pneg %p35
        %p154 = pneg %p59
        %p155 = pneg %p56
        %p156 = pneg %p80
        %p157 = pneg %p77
        %p158 = pneg %p106
        %p159 = pneg %p103
        %s160 = sand.u32 %s93, 1
        %s161 = scalar_lea.sflag [#allocation3], %s160
        %s162 = sand.u32 %s93, 1
        %s163 = smul.addr %s162, 144
        %s164 = scalar_lea.vmem [#allocation2], %s163
        %s165 = smul.u32 2, %s17
        %p166 = scmp.lt.s32.totalorder %s165, 3
        %s167 = scalar_select %p166, %s165, 3
        %s168 = smul.addr %s167, 4
        %s169 = scalar_lea.vmem %s0, %s168
        %s170 = smul.u32 2, %s17
        %s171 = smul.u32 2, %s17
        %v172 = vld [vmem:[%s1] sm:$0xff]
        %v173 = vld [vmem:[%s1 + $0x8] sm:$0xff]
        %v174 = vld [vmem:[%s1 + $0x10] sm:$0xff]
        %v175 = vld [vmem:[%s1 + $0x18] sm:$0xff]
        %v176 = vld [vmem:[%s1 + $0x20] sm:$0xff]
        %v177 = vld [vmem:[%s1 + $0x28] sm:$0xff]
        %v178 = vld [vmem:[%s1 + $0x30] sm:$0xff]
        %v179 = vld [vmem:[%s1 + $0x38] sm:$0xff]
        %v180 = vld [vmem:[%s1 + $0x40] sm:$0xff]
        %v181 = vld [vmem:[%s169] sm:$0xff]
        %v182 = vld [vmem:[%s2] sm:$0xff]
        %v183 = vld [vmem:[%s2 + $0x8] sm:$0xff]
        %v184 = vld [vmem:[%s2 + $0x10] sm:$0xff]
        %v185 = vld [vmem:[%s2 + $0x18] sm:$0xff]
        %v186 = vld [vmem:[%s2 + $0x20] sm:$0xff]
        %v187 = vld [vmem:[%s2 + $0x28] sm:$0xff]
        %v188 = vld [vmem:[%s2 + $0x30] sm:$0xff]
        %v189 = vld [vmem:[%s2 + $0x38] sm:$0xff]
        %v190 = vld [vmem:[%s2 + $0x40] sm:$0xff]
        %192 = vset.pattern.permute.xlu0 0
        %193 = vperm.xlu0 %192, %v182
        %v194 = vpop.permute.xlu0 %193
        %197 = vset.pattern.permute.xlu0 0
        %198 = vperm.xlu0 %197, %v183
        %v199 = vpop.permute.xlu0 %198
        %202 = vset.pattern.permute.xlu0 0
        %203 = vperm.xlu0 %202, %v184
        %v204 = vpop.permute.xlu0 %203
        %207 = vset.pattern.permute.xlu0 0
        %208 = vperm.xlu0 %207, %v185
        %v209 = vpop.permute.xlu0 %208
        %212 = vset.pattern.permute.xlu0 0
        %213 = vperm.xlu0 %212, %v186
        %v214 = vpop.permute.xlu0 %213
        %217 = vset.pattern.permute.xlu0 0
        %218 = vperm.xlu0 %217, %v187
        %v219 = vpop.permute.xlu0 %218
        %222 = vset.pattern.permute.xlu0 0
        %223 = vperm.xlu0 %222, %v188
        %v224 = vpop.permute.xlu0 %223
        %227 = vset.pattern.permute.xlu0 0
        %228 = vperm.xlu0 %227, %v189
        %v229 = vpop.permute.xlu0 %228
        %232 = vset.pattern.permute.xlu0 0
        %233 = vperm.xlu0 %232, %v190
        %v234 = vpop.permute.xlu0 %233
        %237 = vst [vmem:[#allocation1] ss:$2 sm:$0xff] %v181
        %v238 = vld.sshfl [vmem:[#allocation1] sm:$0xff pattern:$0x75316420]
        %v239 = vld.sshfl [vmem:[#allocation1 + $0x8] sm:$0xff pattern:$0x75316420]
        %vm240 = vcmask 31744
        %v242 = vsel %vm240, %v172, 0
        %v245 = vsel %vm240, %v173, 0
        %v248 = vsel %vm240, %v174, 0
        %v251 = vsel %vm240, %v175, 0
        %v254 = vsel %vm240, %v176, 0
        %v257 = vsel %vm240, %v177, 0
        %v260 = vsel %vm240, %v178, 0
        %v263 = vsel %vm240, %v179, 0
        %v266 = vsel %vm240, %v180, 0
        %vm268 = vcmask 1043456
        %v269 = vsel %vm268, %v238, 0
        %v271 = vsel %vm268, %v239, 0
        %273 = vmatpush.msra.mxu0 0.0
        %274 = vmatpush.msra.mxu0 0.0
        %275 = vmatpush.msra.mxu0 0.0
        %276 = vmatpush.msra.mxu0 0.0
        %277 = vmatpush.msra.mxu0 0.0
        %278 = vmatpush.msra.mxu0 0.0
        %279 = vmatpush.msra.mxu0 0.0
        %280 = vmatpush.msra.mxu0 0.0
        %281 = vmatpush.msra.mxu0 0.0
        %282 = vmatpush.msra.mxu0 0.0
        %283 = vmatpush.msra.mxu0 0.0
        %284 = vmatpush.msra.mxu0 0.0
        %285 = vmatpush.msra.mxu0 0.0
        %286 = vmatpush.msra.mxu0 0.0
        %287 = vmatpush.msra.mxu0 0.0
        %288 = vmatpush.msra.mxu0 %v269
        %289 = vmatmul.f32.gmra.mxu0 %v242
        %v290 = vpop.f32.mrf.mxu0
        %v291 = vadd.f32 %v194, %v290
        %292 = vmatmul.f32.gmra.mxu0 %v245
        %v293 = vpop.f32.mrf.mxu0
        %v294 = vadd.f32 %v199, %v293
        %295 = vmatmul.f32.gmra.mxu0 %v248
        %v296 = vpop.f32.mrf.mxu0
        %v297 = vadd.f32 %v204, %v296
        %298 = vmatmul.f32.gmra.mxu0 %v251
        %v299 = vpop.f32.mrf.mxu0
        %v300 = vadd.f32 %v209, %v299
        %301 = vmatmul.f32.gmra.mxu0 %v254
        %v302 = vpop.f32.mrf.mxu0
        %v303 = vadd.f32 %v214, %v302
        %304 = vmatmul.f32.gmra.mxu0 %v257
        %v305 = vpop.f32.mrf.mxu0
        %v306 = vadd.f32 %v219, %v305
        %307 = vmatmul.f32.gmra.mxu0 %v260
        %v308 = vpop.f32.mrf.mxu0
        %v309 = vadd.f32 %v224, %v308
        %310 = vmatmul.f32.gmra.mxu0 %v263
        %v311 = vpop.f32.mrf.mxu0
        %v312 = vadd.f32 %v229, %v311
        %313 = vmatmul.f32.gmra.mxu0 %v266
        %v314 = vpop.f32.mrf.mxu0
        %v315 = vadd.f32 %v234, %v314
        %316 = vdwg.mxu0
        %317 = vmatpush.msra.mxu0 0.0
        %318 = vmatpush.msra.mxu0 0.0
        %319 = vmatpush.msra.mxu0 0.0
        %320 = vmatpush.msra.mxu0 0.0
        %321 = vmatpush.msra.mxu0 0.0
        %322 = vmatpush.msra.mxu0 0.0
        %323 = vmatpush.msra.mxu0 0.0
        %324 = vmatpush.msra.mxu0 0.0
        %325 = vmatpush.msra.mxu0 0.0
        %326 = vmatpush.msra.mxu0 0.0
        %327 = vmatpush.msra.mxu0 0.0
        %328 = vmatpush.msra.mxu0 0.0
        %329 = vmatpush.msra.mxu0 0.0
        %330 = vmatpush.msra.mxu0 0.0
        %331 = vmatpush.msra.mxu0 0.0
        %332 = vmatpush.msra.mxu0 %v271
        %333 = vmatmul.f32.gmra.mxu0 %v242
        %v334 = vpop.f32.mrf.mxu0
        %v335 = vadd.f32 %v194, %v334
        %336 = vmatmul.f32.gmra.mxu0 %v245
        %v337 = vpop.f32.mrf.mxu0
        %v338 = vadd.f32 %v199, %v337
        %339 = vmatmul.f32.gmra.mxu0 %v248
        %v340 = vpop.f32.mrf.mxu0
        %v341 = vadd.f32 %v204, %v340
        %342 = vmatmul.f32.gmra.mxu0 %v251
        %v343 = vpop.f32.mrf.mxu0
        %v344 = vadd.f32 %v209, %v343
        %345 = vmatmul.f32.gmra.mxu0 %v254
        %v346 = vpop.f32.mrf.mxu0
        %v347 = vadd.f32 %v214, %v346
        %348 = vmatmul.f32.gmra.mxu0 %v257
        %v349 = vpop.f32.mrf.mxu0
        %v350 = vadd.f32 %v219, %v349
        %351 = vmatmul.f32.gmra.mxu0 %v260
        %v352 = vpop.f32.mrf.mxu0
        %v353 = vadd.f32 %v224, %v352
        %354 = vmatmul.f32.gmra.mxu0 %v263
        %v355 = vpop.f32.mrf.mxu0
        %v356 = vadd.f32 %v229, %v355
        %357 = vmatmul.f32.gmra.mxu0 %v266
        %v358 = vpop.f32.mrf.mxu0
        %v359 = vadd.f32 %v234, %v358
        %360 = vdwg.mxu0
        %361 = vst [vmem:[%s164] sm:$0xff] %v291
        %362 = vst [vmem:[%s164 + $0x8] sm:$0xff] %v335
        %363 = vst [vmem:[%s164 + $0x10] sm:$0xff] %v294
        %364 = vst [vmem:[%s164 + $0x18] sm:$0xff] %v338
        %365 = vst [vmem:[%s164 + $0x20] sm:$0xff] %v297
        %366 = vst [vmem:[%s164 + $0x28] sm:$0xff] %v341
        %367 = vst [vmem:[%s164 + $0x30] sm:$0xff] %v300
        %368 = vst [vmem:[%s164 + $0x38] sm:$0xff] %v344
        %369 = vst [vmem:[%s164 + $0x40] sm:$0xff] %v303
        %370 = vst [vmem:[%s164 + $0x48] sm:$0xff] %v347
        %371 = vst [vmem:[%s164 + $0x50] sm:$0xff] %v306
        %372 = vst [vmem:[%s164 + $0x58] sm:$0xff] %v350
        %373 = vst [vmem:[%s164 + $0x60] sm:$0xff] %v309
        %374 = vst [vmem:[%s164 + $0x68] sm:$0xff] %v353
        %375 = vst [vmem:[%s164 + $0x70] sm:$0xff] %v312
        %376 = vst [vmem:[%s164 + $0x78] sm:$0xff] %v356
        %377 = vst [vmem:[%s164 + $0x80] sm:$0xff] %v315
        %378 = vst [vmem:[%s164 + $0x88] sm:$0xff] %v359
        %s379 = sand.u32 %s93, 1
        %s380 = scalar_lea.sflag [#allocation3], %s379
        %s381 = sand.u32 %s93, 1
        %s382 = smul.addr %s381, 144
        %s383 = scalar_lea.vmem [#allocation2], %s382
        // Predicated region
        $region33: #{tpu_custom_call.1} parent=31 // pred_check
          %p384 = pneg %p103
        $region34: #{tpu_custom_call.1} parent=31 // pred_check_branch
          %386 = sbr.rel (%p384) target = $region36
        $region35: #{tpu_custom_call.1} parent=31 // pred_region
          %s387 = smul.u32 2, %s17
          %389 = vsyncadd %s380, 0
          %s390 = smul.addr %s387, 8
          %s391 = scalar_lea.hbm %s3, %s390
          %s392 = sshll.u32 %s383, 4
          %s393 = int_to_ptr.vmem [resolvable:$true] %s392
          %s394 = sshll.u32 %s391, 4
          %s395 = int_to_ptr.hbm [resolvable:$true] %s394
          %400 = dma.vmem_to_hbm [thread:$0]  %s393, 2304, %s395, %s380, 256, 512, 16
        $region36: #{tpu_custom_call.1} parent=31 // pred_fallthru
          _
      $region32: #{tpu_custom_call.1} parent=5 // pred_fallthru
        _
      %p401 = scmp.le.s32.totalorder 2, %s12
      // Predicated region
      $region37: #{tpu_custom_call.1} parent=5 // pred_check
        %p402 = pneg %p401
      $region38: #{tpu_custom_call.1} parent=5 // pred_check_branch
        %404 = sbr.rel (%p402) target = $region40
      $region39: #{tpu_custom_call.1} parent=5 // pred_region
        %s405 = ssub.s32 %s12, 2
        // Predicated region
        $region41: #{tpu_custom_call.1} parent=39 // pred_check
          %p406 = pneg %p109
        $region42: #{tpu_custom_call.1} parent=39 // pred_check_branch
          %408 = sbr.rel (%p406) target = $region44
        $region43: #{tpu_custom_call.1} parent=39 // pred_region
          %s409 = sand.u32 %s94, 1
          %s410 = scalar_lea.sflag [#allocation3], %s409
          %s411 = sand.u32 %s94, 1
          %s412 = smul.addr %s411, 144
          %s413 = scalar_lea.vmem [#allocation2], %s412
          %415 = dma.done %s410, 2304
        $region44: #{tpu_custom_call.1} parent=39 // pred_fallthru
          _
      $region40: #{tpu_custom_call.1} parent=5 // pred_fallthru
        _
    $region6: #{tpu_custom_call.1} parent=1 // loop_footer
      %s16 = sadd.s32 1, %s12
    $region7: #{tpu_custom_call.1} parent=1 // loop_footer_branch
      %11 = sbr.rel target = $region3
    $region8: #{tpu_custom_call.1} parent=1 // loop_exit
      _
    %416 = vsyncpa [#allocation3], 1
    %s417 = scalar_lea.sflag [#allocation3], 1
    %418 = vsyncpa %s417, 1

</llo_original>
